<compile_context>
chip_gen: v7x
topology: tpu7x:2x2x1
jax: 0.10.0
libtpu: 0.0.40
codegen_flags: <defaults>
</compile_context>

<pallas_src>
import functools

import jax
import jax.numpy as jnp
import numpy as np
from jax import lax
from jax.experimental import pallas as pl
from jax.experimental.pallas import tpu as pltpu


def _resblock_kernel(x_ref, bw1_ref, b1_ref, bw2_ref, b2_ref, o_ref,
                     *, H, WC, K, NB, res_scale):
    """One grid step = NB images stacked as an (NB*H, WC) lane-dense slab.

    x_ref   : (NB*H, WC)  bf16 (or f32)  flattened NHWC rows (lane = w*C + c)
    bw*_ref : (K*WC, WC)  bf16           dy-concatenated banded conv weights
    b*_ref  : (1, WC)     f32            bias tiled along W
    o_ref   : (NB*H, WC)  output dtype
    """
    pad = K // 2
    M = NB * H
    # Row index within each image: used to zero rows whose dy-shifted source
    # crosses an image boundary (realizes the vertical "same" zero padding).
    h_idx = lax.broadcasted_iota(jnp.int32, (M, 1), 0) % H

    def make_lhs(a):
        """(M, WC) -> (M, K*WC): the K dy-shifted copies side by side, in the
        same dy order as the concatenated banded weight's contraction axis."""
        cols = []
        for dy in range(K):
            s = dy - pad                       # output row r reads input row r+s
            if s == 0:
                cols.append(a)
                continue
            zeros = jnp.zeros((abs(s), WC), a.dtype)
            if s > 0:
                shifted = jnp.concatenate([a[s:, :], zeros], axis=0)
                shifted = jnp.where(h_idx >= H - s, jnp.zeros_like(shifted),
                                    shifted)
            else:
                shifted = jnp.concatenate([zeros, a[:M + s, :]], axis=0)
                shifted = jnp.where(h_idx < -s, jnp.zeros_like(shifted),
                                    shifted)
            cols.append(shifted)
        return jnp.concatenate(cols, axis=1)   # lane-aligned 128-wide blocks

    x_in = x_ref[...]
    x_res = x_in.astype(jnp.float32)           # residual path stays f32

    # conv1 -> bias -> ReLU: a single MXU matmul with an f32 epilogue.
    y = jnp.dot(make_lhs(x_in.astype(jnp.bfloat16)), bw1_ref[...],
                preferred_element_type=jnp.float32)
    y = jnp.maximum(y + b1_ref[...], 0.0)

    # conv2 -> bias -> res_scale -> residual add, fused in-kernel.
    res = jnp.dot(make_lhs(y.astype(jnp.bfloat16)), bw2_ref[...],
                  preferred_element_type=jnp.float32)
    res = (res + b2_ref[...]) * res_scale + x_res
    o_ref[...] = res.astype(o_ref.dtype)


def _banded_weights_cat(wt_hwio, W, dtype=jnp.bfloat16):
    """Fold the dx taps + channel contraction of a KxK conv into K banded
    (W*Cin, W*Cout) matrices and concatenate them along dy (the contraction
    axis), so each conv is a single MXU matmul against an (M, K*W*Cin) LHS.

      bw[dy][wm*Cin + ci, w*Cout + co] = wt[dy, wm - w + pad, ci, co]
      (zero outside the band, which also realizes horizontal "same" padding)

    Built with jnp ops so it stays traceable under jax.jit (no trace-time
    numpy on possibly-traced weights).
    """
    wt = jnp.asarray(wt_hwio, jnp.float32)          # (K, K, Cin, Cout) HWIO
    K = wt.shape[0]
    pad = K // 2
    per_dy = []
    for dy in range(K):
        band = None
        for dx in range(K):
            # eye(W, k=pad-dx)[wm, w] == 1  <=>  wm == w + dx - pad
            blk = jnp.kron(jnp.eye(W, k=pad - dx, dtype=jnp.float32),
                           wt[dy, dx])
            band = blk if band is None else band + blk
        per_dy.append(band)
    return jnp.concatenate(per_dy, axis=0).astype(dtype)   # (K*W*Cin, W*Cout)


def resblock_pallas(x_nhwc, w1, b1, w2, b2, *, res_scale=1.0,
                    batch_block=None, io_dtype=jnp.bfloat16):
    """x_nhwc: (N, H, W, C); w*: (K, K, C, C) HWIO; b*: (C,)."""
    N, H, W, C = x_nhwc.shape
    K = w1.shape[0]
    assert K % 2 == 1, "odd kernel sizes only"
    WC = W * C

    # Batch blocking: stack NB images per grid step so the matmul M dimension
    # (= NB*H rows) feeds the MXU, while keeping N // NB grid steps for the
    # pipeline / megacore split. Default: largest divisor of N with NB*H<=256.
    if batch_block is None:
        nb = 1
        for d in range(1, N + 1):
            if N % d == 0 and d * H <= 256:
                nb = d
    else:
        nb = int(batch_block)
        assert N % nb == 0, "batch_block must divide N"
    M = nb * H

    # bf16 image at the pallas_call boundary (halves input HBM traffic; at
    # deployment feed bf16 activations directly to avoid the convert op).
    x_rows = x_nhwc.reshape(N * H, WC).astype(io_dtype)     # lane = w*C + c
    bw1 = _banded_weights_cat(w1, W)                        # (K*WC, WC) bf16
    bw2 = _banded_weights_cat(w2, W)
    b1r = jnp.tile(b1.astype(jnp.float32), W).reshape(1, WC)
    b2r = jnp.tile(b2.astype(jnp.float32), W).reshape(1, WC)

    kernel = functools.partial(_resblock_kernel, H=H, WC=WC, K=K, NB=nb,
                               res_scale=float(res_scale))

    resident = pl.Buffered(1)   # grid-invariant blocks: no dead second buffer
    grid_spec = pltpu.PrefetchScalarGridSpec(
        num_scalar_prefetch=0,
        grid=(N // nb,),
        in_specs=[
            pl.BlockSpec((M, WC), lambda n: (n, 0)),                 # images
            pl.BlockSpec((K * WC, WC), lambda n: (0, 0),
                         pipeline_mode=resident),                    # banded w1
            pl.BlockSpec((1, WC), lambda n: (0, 0),
                         pipeline_mode=resident),                    # b1
            pl.BlockSpec((K * WC, WC), lambda n: (0, 0),
                         pipeline_mode=resident),                    # banded w2
            pl.BlockSpec((1, WC), lambda n: (0, 0),
                         pipeline_mode=resident),                    # b2
        ],
        out_specs=pl.BlockSpec((M, WC), lambda n: (n, 0)),
    )

    out_rows = pl.pallas_call(
        kernel,
        grid_spec=grid_spec,
        out_shape=jax.ShapeDtypeStruct((N * H, WC), x_nhwc.dtype),
        compiler_params=pltpu.CompilerParams(
            dimension_semantics=("parallel",),
            # Tiny here (<1 MiB); re-derive when scaling H / W-strips,
            # especially on v7x (64 MiB physical VMEM per TensorCore).
            vmem_limit_bytes=32 * 1024 * 1024),
    )(x_rows, bw1, b1r, bw2, b2r)

    return out_rows.reshape(N, H, W, C)


def resblock_ref(x_nhwc, w1, b1, w2, b2, res_scale=1.0):
    """Pure-JAX f32 reference (same semantics as the PyTorch ResBlock)."""
    dn = lax.conv_dimension_numbers(x_nhwc.shape, w1.shape,
                                    ("NHWC", "HWIO", "NHWC"))
    y = lax.conv_general_dilated(x_nhwc, w1, (1, 1), "SAME",
                                 dimension_numbers=dn) + b1
    y = jnp.maximum(y, 0.0)
    y = lax.conv_general_dilated(y, w2, (1, 1), "SAME",
                                 dimension_numbers=dn) + b2
    return y * res_scale + x_nhwc


if __name__ == "__main__":
    # ResBlock(conv=default_conv, n_feats=8, kernel_size=3, res_scale=1).
    N, C, H, W = 4, 8, 16, 16
    K = 3
    res_scale = 1.0

    key = jax.random.PRNGKey(0)
    kx, kw1, kb1, kw2, kb2 = jax.random.split(key, 5)

    # PyTorch-style NCHW input; deterministic synthetic parameters.
    x_nchw = jax.random.normal(kx, (N, C, H, W), jnp.float32)
    w1_oihw = jax.random.normal(kw1, (C, C, K, K), jnp.float32) * 0.1
    w2_oihw = jax.random.normal(kw2, (C, C, K, K), jnp.float32) * 0.1
    b1 = jax.random.normal(kb1, (C,), jnp.float32) * 0.1
    b2 = jax.random.normal(kb2, (C,), jnp.float32) * 0.1

    x_nhwc = jnp.transpose(x_nchw, (0, 2, 3, 1))
    w1 = jnp.transpose(w1_oihw, (2, 3, 1, 0))   # OIHW -> HWIO (kh, kw, ci, co)
    w2 = jnp.transpose(w2_oihw, (2, 3, 1, 0))

    # batch_block=2 -> grid=(2,), M = 32 rows per step (exercises both the
    # batched slab and the multi-step pipeline at this tiny demo size).
    out_nhwc = resblock_pallas(x_nhwc, w1, b1, w2, b2,
                               res_scale=res_scale, batch_block=2)
    out_nhwc = jax.block_until_ready(out_nhwc)
    out_nchw = jnp.transpose(out_nhwc, (0, 3, 1, 2))  # back to PyTorch layout

    # The kernel deliberately feeds the image/activations (and the residual)
    # in bf16 with f32 accumulation/epilogue; compare against the f32
    # reference evaluated on the same bf16-rounded input — that rounding is
    # the kernel's documented accuracy floor.
    x_q = x_nhwc.astype(jnp.bfloat16).astype(jnp.float32)
    ref_nhwc = resblock_ref(x_q, w1, b1, w2, b2, res_scale=res_scale)
    np.testing.assert_allclose(np.asarray(out_nhwc), np.asarray(ref_nhwc),
                               rtol=2e-2, atol=2e-2)

    print("KERNEL_OK")
</pallas_src>

<mosaic_0001>
module attributes {stable_mosaic.version = 11 : i64} {
  func.func @_resblock_kernel(%arg0: i32, %arg1: memref<32x128xbf16, #tpu.memory_space<vmem>>, %arg2: memref<384x128xbf16, #tpu.memory_space<vmem>>, %arg3: memref<1x128xf32, #tpu.memory_space<vmem>>, %arg4: memref<384x128xbf16, #tpu.memory_space<vmem>>, %arg5: memref<1x128xf32, #tpu.memory_space<vmem>>, %arg6: memref<32x128xf32, #tpu.memory_space<vmem>>) attributes {dimension_semantics = [#tpu.dimension_semantics<parallel>], iteration_bounds = array<i64: 2>, scalar_prefetch = 0 : i64, scratch_operands = 0 : i64, tpu.core_type = #tpu.core_type<tc>, window_params = [{transform_indices = @transform_0, window_bounds = array<i64: 32, 128>}, {pipeline_mode = #tpu.pipeline_mode<synchronous>, transform_indices = @transform_1, window_bounds = array<i64: 384, 128>}, {pipeline_mode = #tpu.pipeline_mode<synchronous>, transform_indices = @transform_2, window_bounds = array<i64: 1, 128>}, {pipeline_mode = #tpu.pipeline_mode<synchronous>, transform_indices = @transform_3, window_bounds = array<i64: 384, 128>}, {pipeline_mode = #tpu.pipeline_mode<synchronous>, transform_indices = @transform_4, window_bounds = array<i64: 1, 128>}, {transform_indices = @transform_5, window_bounds = array<i64: 32, 128>}]} {
    %0 = tpu.iota {dimensions = array<i32: 0>} : vector<32x1xi32>
    %c16_i32 = arith.constant 16 : i32
    %c0_i32 = arith.constant 0 : i32
    %1 = arith.cmpi eq, %c16_i32, %c0_i32 : i32
    %c1_i32 = arith.constant 1 : i32
    %2 = arith.select %1, %c1_i32, %c16_i32 : i32
    %3 = vector.broadcast %2 : i32 to vector<32x1xi32>
    %4 = arith.remsi %0, %3 : vector<32x1xi32>
    %c0_i32_0 = arith.constant 0 : i32
    %5 = vector.broadcast %c0_i32_0 : i32 to vector<32x1xi32>
    %6 = arith.cmpi ne, %4, %5 : vector<32x1xi32>
    %c0_i32_1 = arith.constant 0 : i32
    %7 = vector.broadcast %c0_i32_1 : i32 to vector<32x1xi32>
    %8 = arith.cmpi slt, %4, %7 : vector<32x1xi32>
    %c0_i32_2 = arith.constant 0 : i32
    %9 = arith.cmpi slt, %2, %c0_i32_2 : i32
    %10 = vector.broadcast %9 : i1 to vector<32x1xi1>
    %11 = vector.broadcast %10 : vector<32x1xi1> to vector<32x1xi1>
    %12 = arith.xori %8, %11 : vector<32x1xi1>
    %13 = arith.andi %12, %6 : vector<32x1xi1>
    %14 = vector.broadcast %2 : i32 to vector<32x1xi32>
    %15 = arith.addi %4, %14 : vector<32x1xi32>
    %16 = arith.select %13, %15, %4 : vector<32x1xi1>, vector<32x1xi32>
    %c0 = arith.constant 0 : index
    %c0_3 = arith.constant 0 : index
    %17 = vector.load %arg1[%c0, %c0_3] : memref<32x128xbf16, #tpu.memory_space<vmem>>, vector<32x128xbf16>
    %18 = arith.extf %17 : vector<32x128xbf16> to vector<32x128xf32>
    %cst = arith.constant 0.000000e+00 : bf16
    %19 = vector.broadcast %cst : bf16 to vector<1x128xbf16>
    %20 = vector.extract_strided_slice %17 {offsets = [0, 0], sizes = [31, 128], strides = [1, 1]} : vector<32x128xbf16> to vector<31x128xbf16>
    %21 = tpu.concatenate %19, %20 in 0 : vector<1x128xbf16>, vector<31x128xbf16> -> vector<32x128xbf16>
    %c1_i32_4 = arith.constant 1 : i32
    %22 = vector.broadcast %c1_i32_4 : i32 to vector<32x1xi32>
    %23 = arith.cmpi slt, %16, %22 : vector<32x1xi32>
    %cst_5 = arith.constant 0.000000e+00 : bf16
    %24 = vector.broadcast %cst_5 : bf16 to vector<32x128xbf16>
    %25 = vector.shape_cast %23 : vector<32x1xi1> to vector<32x1xi1>
    %26 = vector.broadcast %25 : vector<32x1xi1> to vector<32x128xi1>
    %27 = arith.select %26, %24, %21 : vector<32x128xi1>, vector<32x128xbf16>
    %cst_6 = arith.constant 0.000000e+00 : bf16
    %28 = vector.broadcast %cst_6 : bf16 to vector<1x128xbf16>
    %29 = vector.extract_strided_slice %17 {offsets = [1, 0], sizes = [31, 128], strides = [1, 1]} : vector<32x128xbf16> to vector<31x128xbf16>
    %30 = tpu.concatenate %29, %28 in 0 : vector<31x128xbf16>, vector<1x128xbf16> -> vector<32x128xbf16>
    %c15_i32 = arith.constant 15 : i32
    %31 = vector.broadcast %c15_i32 : i32 to vector<32x1xi32>
    %32 = arith.cmpi sge, %16, %31 : vector<32x1xi32>
    %cst_7 = arith.constant 0.000000e+00 : bf16
    %33 = vector.broadcast %cst_7 : bf16 to vector<32x128xbf16>
    %34 = vector.shape_cast %32 : vector<32x1xi1> to vector<32x1xi1>
    %35 = vector.broadcast %34 : vector<32x1xi1> to vector<32x128xi1>
    %36 = arith.select %35, %33, %30 : vector<32x128xi1>, vector<32x128xbf16>
    %37 = tpu.concatenate %27, %17, %36 in 1 : vector<32x128xbf16>, vector<32x128xbf16>, vector<32x128xbf16> -> vector<32x384xbf16>
    %c0_8 = arith.constant 0 : index
    %c0_9 = arith.constant 0 : index
    %38 = vector.load %arg2[%c0_8, %c0_9] : memref<384x128xbf16, #tpu.memory_space<vmem>>, vector<384x128xbf16>
    %cst_10 = arith.constant dense<0.000000e+00> : vector<32x128xf32>
    %39 = tpu.matmul %37, %38, %cst_10 {dimension_numbers = #tpu.dot_dimension_numbers<[1], [0], [0], [1], [0, 0, 1, 1], [], []>} : vector<32x384xbf16>, vector<384x128xbf16>, vector<32x128xf32> -> vector<32x128xf32>
    %c0_11 = arith.constant 0 : index
    %c0_12 = arith.constant 0 : index
    %40 = vector.load %arg3[%c0_11, %c0_12] : memref<1x128xf32, #tpu.memory_space<vmem>>, vector<1x128xf32>
    %41 = vector.broadcast %40 : vector<1x128xf32> to vector<32x128xf32>
    %42 = arith.addf %39, %41 : vector<32x128xf32>
    %cst_13 = arith.constant 0.000000e+00 : f32
    %43 = vector.broadcast %cst_13 : f32 to vector<32x128xf32>
    %44 = arith.maximumf %42, %43 : vector<32x128xf32>
    %45 = arith.truncf %44 : vector<32x128xf32> to vector<32x128xbf16>
    %cst_14 = arith.constant 0.000000e+00 : bf16
    %46 = vector.broadcast %cst_14 : bf16 to vector<1x128xbf16>
    %47 = vector.extract_strided_slice %45 {offsets = [0, 0], sizes = [31, 128], strides = [1, 1]} : vector<32x128xbf16> to vector<31x128xbf16>
    %48 = tpu.concatenate %46, %47 in 0 : vector<1x128xbf16>, vector<31x128xbf16> -> vector<32x128xbf16>
    %c1_i32_15 = arith.constant 1 : i32
    %49 = vector.broadcast %c1_i32_15 : i32 to vector<32x1xi32>
    %50 = arith.cmpi slt, %16, %49 : vector<32x1xi32>
    %cst_16 = arith.constant 0.000000e+00 : bf16
    %51 = vector.broadcast %cst_16 : bf16 to vector<32x128xbf16>
    %52 = vector.shape_cast %50 : vector<32x1xi1> to vector<32x1xi1>
    %53 = vector.broadcast %52 : vector<32x1xi1> to vector<32x128xi1>
    %54 = arith.select %53, %51, %48 : vector<32x128xi1>, vector<32x128xbf16>
    %cst_17 = arith.constant 0.000000e+00 : bf16
    %55 = vector.broadcast %cst_17 : bf16 to vector<1x128xbf16>
    %56 = vector.extract_strided_slice %45 {offsets = [1, 0], sizes = [31, 128], strides = [1, 1]} : vector<32x128xbf16> to vector<31x128xbf16>
    %57 = tpu.concatenate %56, %55 in 0 : vector<31x128xbf16>, vector<1x128xbf16> -> vector<32x128xbf16>
    %c15_i32_18 = arith.constant 15 : i32
    %58 = vector.broadcast %c15_i32_18 : i32 to vector<32x1xi32>
    %59 = arith.cmpi sge, %16, %58 : vector<32x1xi32>
    %cst_19 = arith.constant 0.000000e+00 : bf16
    %60 = vector.broadcast %cst_19 : bf16 to vector<32x128xbf16>
    %61 = vector.shape_cast %59 : vector<32x1xi1> to vector<32x1xi1>
    %62 = vector.broadcast %61 : vector<32x1xi1> to vector<32x128xi1>
    %63 = arith.select %62, %60, %57 : vector<32x128xi1>, vector<32x128xbf16>
    %64 = tpu.concatenate %54, %45, %63 in 1 : vector<32x128xbf16>, vector<32x128xbf16>, vector<32x128xbf16> -> vector<32x384xbf16>
    %c0_20 = arith.constant 0 : index
    %c0_21 = arith.constant 0 : index
    %65 = vector.load %arg4[%c0_20, %c0_21] : memref<384x128xbf16, #tpu.memory_space<vmem>>, vector<384x128xbf16>
    %cst_22 = arith.constant dense<0.000000e+00> : vector<32x128xf32>
    %66 = tpu.matmul %64, %65, %cst_22 {dimension_numbers = #tpu.dot_dimension_numbers<[1], [0], [0], [1], [0, 0, 1, 1], [], []>} : vector<32x384xbf16>, vector<384x128xbf16>, vector<32x128xf32> -> vector<32x128xf32>
    %c0_23 = arith.constant 0 : index
    %c0_24 = arith.constant 0 : index
    %67 = vector.load %arg5[%c0_23, %c0_24] : memref<1x128xf32, #tpu.memory_space<vmem>>, vector<1x128xf32>
    %68 = vector.broadcast %67 : vector<1x128xf32> to vector<32x128xf32>
    %69 = arith.addf %66, %68 : vector<32x128xf32>
    %cst_25 = arith.constant 1.000000e+00 : f32
    %70 = vector.broadcast %cst_25 : f32 to vector<32x128xf32>
    %71 = arith.mulf %69, %70 : vector<32x128xf32>
    %72 = arith.addf %71, %18 : vector<32x128xf32>
    %c0_26 = arith.constant 0 : index
    %c0_27 = arith.constant 0 : index
    %73 = vector.load %arg6[%c0_26, %c0_27] : memref<32x128xf32, #tpu.memory_space<vmem>>, vector<32x128xf32>
    tpu.vector_store %arg6[%c0_26, %c0_27], %72 {strides = array<i32>} : memref<32x128xf32, #tpu.memory_space<vmem>>, vector<32x128xf32>,
    return
  }
  func.func @transform_0(%arg0: i32) -> (i32, i32) {
    %c0_i32 = arith.constant 0 : i32
    %c0_i32_0 = arith.constant 0 : i32
    return %arg0, %c0_i32 : i32, i32
  }
  func.func @transform_1(%arg0: i32) -> (i32, i32) {
    %c0_i32 = arith.constant 0 : i32
    %c0_i32_0 = arith.constant 0 : i32
    %c0_i32_1 = arith.constant 0 : i32
    return %c0_i32, %c0_i32_0 : i32, i32
  }
  func.func @transform_2(%arg0: i32) -> (i32, i32) {
    %c0_i32 = arith.constant 0 : i32
    %c0_i32_0 = arith.constant 0 : i32
    %c0_i32_1 = arith.constant 0 : i32
    return %c0_i32, %c0_i32_0 : i32, i32
  }
  func.func @transform_3(%arg0: i32) -> (i32, i32) {
    %c0_i32 = arith.constant 0 : i32
    %c0_i32_0 = arith.constant 0 : i32
    %c0_i32_1 = arith.constant 0 : i32
    return %c0_i32, %c0_i32_0 : i32, i32
  }
  func.func @transform_4(%arg0: i32) -> (i32, i32) {
    %c0_i32 = arith.constant 0 : i32
    %c0_i32_0 = arith.constant 0 : i32
    %c0_i32_1 = arith.constant 0 : i32
    return %c0_i32, %c0_i32_0 : i32, i32
  }
  func.func @transform_5(%arg0: i32) -> (i32, i32) {
    %c0_i32 = arith.constant 0 : i32
    %c0_i32_0 = arith.constant 0 : i32
    return %arg0, %c0_i32 : i32, i32
  }
}

</mosaic_0001>

<llo_original>
// kernel: tpu_custom_call.1
$region0: #{tpu_custom_call.1}
  #allocation0 [shape = 'u32[]', space=smem, size = 0x4, offset = 0x4, fixed_abs, tag = 'smem constant byte address 0x4 - core index']
  #allocation1 [shape = 'u32[144,128]{1,0:T(1,128)}', space=vmem, size = 0x12000, scoped, tag = 'internal scratch']
  %s0 = inlined_call_operand.hbm [shape: bf16[64,128], index: 0, kind: input, shape index: {}]
  %s1 = inlined_call_operand.hbm [shape: bf16[384,128], index: 1, kind: input, shape index: {}]
  %s2 = inlined_call_operand.vmem [shape: f32[1,128], index: 2, kind: input, shape index: {}]
  %s3 = inlined_call_operand.hbm [shape: bf16[384,128], index: 3, kind: input, shape index: {}]
  %s4 = inlined_call_operand.vmem [shape: f32[1,128], index: 4, kind: input, shape index: {}]
  %s5 = inlined_call_operand.hbm [shape: f32[64,128], index: 5, kind: output, shape index: {}]
  %s6 = sld [smem:[#allocation0]]
  $region65: #{tpu_custom_call.1} parent=0
    _
  %s8 = ssub.s32 1, %s6
  %s9 = scalar_select 0, %s8, %s6
  $region1: #{tpu_custom_call.1} parent=0
    #allocation2 [shape = 'u8[16384]{0}', space=vmem, size = 0x4000, scoped, tag = 'input window, operand 0']
    #allocation3 [shape = 's32[2]{0}', space=sflag, size = 0x8, scoped, tag = 'scoped memory for tpu_custom_call.1']
    #allocation4 [shape = 's32[2]{0}', space=sflag, size = 0x8, scoped, tag = 'scoped memory for tpu_custom_call.1']
    #allocation5 [shape = 'u8[98304]{0}', space=vmem, size = 0x18000, scoped, tag = 'input window, operand 1, single buffered']
    #allocation6 [shape = 's32[1]{0}', space=sflag, size = 0x4, scoped, tag = 'scoped memory for tpu_custom_call.1']
    #allocation7 [shape = 'u8[98304]{0}', space=vmem, size = 0x18000, scoped, tag = 'input window, operand 3, single buffered']
    #allocation8 [shape = 'u8[32768]{0}', space=vmem, size = 0x8000, scoped, tag = 'output window, operand 0']
    %10 = vsyncpa [#allocation3], 0
    %s11 = scalar_lea.sflag [#allocation3], 1
    %12 = vsyncpa %s11, 0
    %13 = vsyncpa [#allocation6], 0
    %14 = vsyncpa [#allocation4], 0
    %s15 = scalar_lea.sflag [#allocation4], 1
    %16 = vsyncpa %s15, 0
    loop: start=0, step=1, limit=4
    $region2: #{tpu_custom_call.1} parent=1 // loop_pre_header
      _
    $region3: #{tpu_custom_call.1} parent=1 // loop_header
      %s18 = sphi 0, %s22
      %p19 = scmp.ge.s32.totalorder %s18, 4
      %s28 = sphi 0, %s30
      %s31 = sphi 0, %s28
      %s32 = sphi 0, %s31
      %s48 = sphi 0, %s32
      %s52 = sphi 0, %s52
      %s54 = sphi 0, %s52
      %s55 = sphi 0, %s54
      %s69 = sphi 0, %s55
      %s73 = sphi 0, %s73
      %s75 = sphi 0, %s73
      %s76 = sphi 0, %s75
      %s90 = sphi 0, %s76
      %s94 = sphi 0, %s94
      %s96 = sphi 0, %s94
      %s97 = sphi 0, %s96
      %s111 = sphi 0, %s97
      %s115 = sphi 0, %s115
      %s117 = sphi 0, %s115
      %s118 = sphi 0, %s117
      %s132 = sphi 0, %s118
      %s138 = sphi 0, %s140
      %s141 = sphi 0, %s138
      %s142 = sphi 0, %s141
      %s158 = sphi 0, %s142
    $region4: #{tpu_custom_call.1} parent=1 // loop_header_branch
      %21 = sbr.rel (%p19) target = $region8
    $region5: #{tpu_custom_call.1} parent=1 // loop_body
      %s23 = ssub.s32 %s18, 1
      %s24 = ssub.s32 %s18, 2
      %s25 = sadd.s32 %s18, 1
      %s26 = ssub.s32 %s18, %s25
      %p27 = scmp.eq.s32.totalorder %s26, 0
      %s29 = sadd.s32 %s28, 1
      %s30 = scalar_select %p27, %s28, %s29
      %p33 = pneg %p27
      %p34 = scmp.eq.s32.totalorder %s18, 1
      %p35 = por %p33, %p34
      %p36 = scmp.ne.s32.totalorder %s28, %s31
      %p37 = scmp.eq.s32.totalorder %s18, 0
      %p38 = por %p36, %p37
      %p39 = scmp.ne.s32.totalorder %s28, %s31
      %p40 = scmp.eq.s32.totalorder %s23, 1
      %p41 = por %p39, %p40
      %p42 = scmp.ne.s32.totalorder %s31, %s32
      %p43 = scmp.eq.s32.totalorder %s23, 0
      %p44 = por %p42, %p43
      %p45 = scmp.ne.s32.totalorder %s31, %s32
      %p46 = scmp.eq.s32.totalorder %s24, 1
      %p47 = por %p45, %p46
      %p49 = scmp.ne.s32.totalorder %s32, %s48
      %p50 = scmp.eq.s32.totalorder %s24, 0
      %p51 = por %p49, %p50
      %s53 = sadd.s32 %s52, 1
      %p56 = scmp.eq.s32.totalorder %s18, 1
      %p57 = scmp.ne.s32.totalorder %s52, %s54
      %p58 = scmp.eq.s32.totalorder %s18, 0
      %p59 = por %p57, %p58
      %p60 = scmp.ne.s32.totalorder %s52, %s54
      %p61 = scmp.eq.s32.totalorder %s23, 1
      %p62 = por %p60, %p61
      %p63 = scmp.ne.s32.totalorder %s54, %s55
      %p64 = scmp.eq.s32.totalorder %s23, 0
      %p65 = por %p63, %p64
      %p66 = scmp.ne.s32.totalorder %s54, %s55
      %p67 = scmp.eq.s32.totalorder %s24, 1
      %p68 = por %p66, %p67
      %p70 = scmp.ne.s32.totalorder %s55, %s69
      %p71 = scmp.eq.s32.totalorder %s24, 0
      %p72 = por %p70, %p71
      %s74 = sadd.s32 %s73, 1
      %p77 = scmp.eq.s32.totalorder %s18, 1
      %p78 = scmp.ne.s32.totalorder %s73, %s75
      %p79 = scmp.eq.s32.totalorder %s18, 0
      %p80 = por %p78, %p79
      %p81 = scmp.ne.s32.totalorder %s73, %s75
      %p82 = scmp.eq.s32.totalorder %s23, 1
      %p83 = por %p81, %p82
      %p84 = scmp.ne.s32.totalorder %s75, %s76
      %p85 = scmp.eq.s32.totalorder %s23, 0
      %p86 = por %p84, %p85
      %p87 = scmp.ne.s32.totalorder %s75, %s76
      %p88 = scmp.eq.s32.totalorder %s24, 1
      %p89 = por %p87, %p88
      %p91 = scmp.ne.s32.totalorder %s76, %s90
      %p92 = scmp.eq.s32.totalorder %s24, 0
      %p93 = por %p91, %p92
      %s95 = sadd.s32 %s94, 1
      %p98 = scmp.eq.s32.totalorder %s18, 1
      %p99 = scmp.ne.s32.totalorder %s94, %s96
      %p100 = scmp.eq.s32.totalorder %s18, 0
      %p101 = por %p99, %p100
      %p102 = scmp.ne.s32.totalorder %s94, %s96
      %p103 = scmp.eq.s32.totalorder %s23, 1
      %p104 = por %p102, %p103
      %p105 = scmp.ne.s32.totalorder %s96, %s97
      %p106 = scmp.eq.s32.totalorder %s23, 0
      %p107 = por %p105, %p106
      %p108 = scmp.ne.s32.totalorder %s96, %s97
      %p109 = scmp.eq.s32.totalorder %s24, 1
      %p110 = por %p108, %p109
      %p112 = scmp.ne.s32.totalorder %s97, %s111
      %p113 = scmp.eq.s32.totalorder %s24, 0
      %p114 = por %p112, %p113
      %s116 = sadd.s32 %s115, 1
      %p119 = scmp.eq.s32.totalorder %s18, 1
      %p120 = scmp.ne.s32.totalorder %s115, %s117
      %p121 = scmp.eq.s32.totalorder %s18, 0
      %p122 = por %p120, %p121
      %p123 = scmp.ne.s32.totalorder %s115, %s117
      %p124 = scmp.eq.s32.totalorder %s23, 1
      %p125 = por %p123, %p124
      %p126 = scmp.ne.s32.totalorder %s117, %s118
      %p127 = scmp.eq.s32.totalorder %s23, 0
      %p128 = por %p126, %p127
      %p129 = scmp.ne.s32.totalorder %s117, %s118
      %p130 = scmp.eq.s32.totalorder %s24, 1
      %p131 = por %p129, %p130
      %p133 = scmp.ne.s32.totalorder %s118, %s132
      %p134 = scmp.eq.s32.totalorder %s24, 0
      %p135 = por %p133, %p134
      %s136 = ssub.s32 %s18, %s25
      %p137 = scmp.eq.s32.totalorder %s136, 0
      %s139 = sadd.s32 %s138, 1
      %s140 = scalar_select %p137, %s138, %s139
      %p143 = pneg %p137
      %p144 = scmp.eq.s32.totalorder %s18, 1
      %p145 = por %p143, %p144
      %p146 = scmp.ne.s32.totalorder %s138, %s141
      %p147 = scmp.eq.s32.totalorder %s18, 0
      %p148 = por %p146, %p147
      %p149 = scmp.ne.s32.totalorder %s138, %s141
      %p150 = scmp.eq.s32.totalorder %s23, 1
      %p151 = por %p149, %p150
      %p152 = scmp.ne.s32.totalorder %s141, %s142
      %p153 = scmp.eq.s32.totalorder %s23, 0
      %p154 = por %p152, %p153
      %p155 = scmp.ne.s32.totalorder %s141, %s142
      %p156 = scmp.eq.s32.totalorder %s24, 1
      %p157 = por %p155, %p156
      %p159 = scmp.ne.s32.totalorder %s142, %s158
      %p160 = scmp.eq.s32.totalorder %s24, 0
      %p161 = por %p159, %p160
      %p162 = scmp.le.s32.totalorder 1, %s18
      %p163 = scmp.lt.s32.totalorder %s18, 3
      %p164 = pnand %p162, %p163
      %p165 = pneg %p164
      // Predicated region
      $region9: #{tpu_custom_call.1} parent=5 // pred_check
        _
      $region10: #{tpu_custom_call.1} parent=5 // pred_check_branch
        %167 = sbr.rel (%p164) target = $region12
      $region11: #{tpu_custom_call.1} parent=5 // pred_region
        %s168 = ssub.s32 %s18, 1
        // Predicated region
        $region13: #{tpu_custom_call.1} parent=11 // pred_check
          %p169 = pneg %p65
        $region14: #{tpu_custom_call.1} parent=11 // pred_check_branch
          %171 = sbr.rel (%p169) target = $region16
        $region15: #{tpu_custom_call.1} parent=11 // pred_region
          %s173 = ssub.s32 3072, 3072
          %174 = vsyncadd [#allocation6], %s173
          %s175 = sshll.u32 [#allocation5], 4
          %s176 = int_to_ptr.vmem [resolvable:$true] %s175
          %181 = dma.hbm_to_vmem [thread:$0]  %s1, 3072, %s176, [#allocation6], 64, 64, 4
        $region16: #{tpu_custom_call.1} parent=11 // pred_fallthru
          _
        // Predicated region
        $region17: #{tpu_custom_call.1} parent=11 // pred_check
          %p182 = pneg %p86
        $region18: #{tpu_custom_call.1} parent=11 // pred_check_branch
          %184 = sbr.rel (%p182) target = $region20
        $region19: #{tpu_custom_call.1} parent=11 // pred_region
          _
        $region20: #{tpu_custom_call.1} parent=11 // pred_fallthru
          _
        // Predicated region
        $region21: #{tpu_custom_call.1} parent=11 // pred_check
          %p185 = pneg %p107
        $region22: #{tpu_custom_call.1} parent=11 // pred_check_branch
          %187 = sbr.rel (%p185) target = $region24
        $region23: #{tpu_custom_call.1} parent=11 // pred_region
          %s189 = ssub.s32 3072, 3072
          %190 = vsyncadd [#allocation6], %s189
          %s191 = sshll.u32 [#allocation7], 4
          %s192 = int_to_ptr.vmem [resolvable:$true] %s191
          %197 = dma.hbm_to_vmem [thread:$0]  %s3, 3072, %s192, [#allocation6], 64, 64, 4
        $region24: #{tpu_custom_call.1} parent=11 // pred_fallthru
          _
        // Predicated region
        $region25: #{tpu_custom_call.1} parent=11 // pred_check
          %p198 = pneg %p128
        $region26: #{tpu_custom_call.1} parent=11 // pred_check_branch
          %200 = sbr.rel (%p198) target = $region28
        $region27: #{tpu_custom_call.1} parent=11 // pred_region
          _
        $region28: #{tpu_custom_call.1} parent=11 // pred_fallthru
          _
      $region12: #{tpu_custom_call.1} parent=5 // pred_fallthru
        _
      %p201 = scmp.lt.s32.totalorder %s18, 2
      // Predicated region
      $region29: #{tpu_custom_call.1} parent=5 // pred_check
        %p202 = pneg %p201
      $region30: #{tpu_custom_call.1} parent=5 // pred_check_branch
        %204 = sbr.rel (%p202) target = $region32
      $region31: #{tpu_custom_call.1} parent=5 // pred_region
        // Predicated region
        $region33: #{tpu_custom_call.1} parent=31 // pred_check
          %p205 = pneg %p38
        $region34: #{tpu_custom_call.1} parent=31 // pred_check_branch
          %207 = sbr.rel (%p205) target = $region36
        $region35: #{tpu_custom_call.1} parent=31 // pred_region
          %s208 = sand.u32 %s28, 1
          %s209 = scalar_lea.sflag [#allocation3], %s208
          %s210 = sand.u32 %s28, 1
          %s211 = smul.addr %s210, 16
          %s212 = scalar_lea.vmem [#allocation2], %s211
          %s213 = smul.u32 4, %s18
          %s215 = ssub.s32 256, 256
          %216 = vsyncadd %s209, %s215
          %s217 = smul.addr %s213, 64
          %s218 = scalar_lea.hbm %s0, %s217
          %s219 = sshll.u32 %s212, 4
          %s220 = int_to_ptr.vmem [resolvable:$true] %s219
          %225 = dma.hbm_to_vmem [thread:$0]  %s218, 256, %s220, %s209, 64, 64, 4
        $region36: #{tpu_custom_call.1} parent=31 // pred_fallthru
          _
      $region32: #{tpu_custom_call.1} parent=5 // pred_fallthru
        _
      %p226 = scmp.le.s32.totalorder 1, %s18
      %p227 = scmp.lt.s32.totalorder %s18, 3
      %p228 = pnand %p226, %p227
      %p229 = pneg %p228
      // Predicated region
      $region37: #{tpu_custom_call.1} parent=5 // pred_check
        _
      $region38: #{tpu_custom_call.1} parent=5 // pred_check_branch
        %231 = sbr.rel (%p228) target = $region40
      $region39: #{tpu_custom_call.1} parent=5 // pred_region
        %s232 = ssub.s32 %s18, 1
        %s233 = sand.u32 %s31, 1
        %s234 = scalar_lea.sflag [#allocation3], %s233
        %s235 = sand.u32 %s31, 1
        %s236 = smul.addr %s235, 16
        %s237 = scalar_lea.vmem [#allocation2], %s236
        // Predicated region
        $region41: #{tpu_custom_call.1} parent=39 // pred_check
          %p238 = pneg %p44
        $region42: #{tpu_custom_call.1} parent=39 // pred_check_branch
          %240 = sbr.rel (%p238) target = $region44
        $region43: #{tpu_custom_call.1} parent=39 // pred_region
          %241 = dma.done %s234, 256
        $region44: #{tpu_custom_call.1} parent=39 // pred_fallthru
          _
        // Predicated region
        $region45: #{tpu_custom_call.1} parent=39 // pred_check
          %p242 = pneg %p65
        $region46: #{tpu_custom_call.1} parent=39 // pred_check_branch
          %244 = sbr.rel (%p242) target = $region48
        $region47: #{tpu_custom_call.1} parent=39 // pred_region
          %245 = dma.done [#allocation6], 3072
        $region48: #{tpu_custom_call.1} parent=39 // pred_fallthru
          _
        // Predicated region
        $region49: #{tpu_custom_call.1} parent=39 // pred_check
          %p246 = pneg %p107
        $region50: #{tpu_custom_call.1} parent=39 // pred_check_branch
          %248 = sbr.rel (%p246) target = $region52
        $region51: #{tpu_custom_call.1} parent=39 // pred_region
          %249 = dma.done [#allocation6], 3072
        $region52: #{tpu_custom_call.1} parent=39 // pred_fallthru
          _
        %s250 = sand.u32 %s31, 1
        %s251 = scalar_lea.sflag [#allocation3], %s250
        %s252 = sand.u32 %s31, 1
        %s253 = smul.addr %s252, 16
        %s254 = scalar_lea.vmem [#allocation2], %s253
        %p255 = pneg %p44
        %p256 = pneg %p41
        %p257 = pneg %p65
        %p258 = pneg %p62
        %p259 = pneg %p86
        %p260 = pneg %p83
        %p261 = pneg %p107
        %p262 = pneg %p104
        %p263 = pneg %p128
        %p264 = pneg %p125
        %p265 = pneg %p154
        %p266 = pneg %p151
        %s267 = sand.u32 %s141, 1
        %s268 = scalar_lea.sflag [#allocation4], %s267
        %s269 = sand.u32 %s141, 1
        %s270 = smul.addr %s269, 32
        %s271 = scalar_lea.vmem [#allocation8], %s270
        %s272 = smul.u32 4, %s23
        %s273 = smul.u32 4, %s23
        %v277 = vlaneseq
        %v278 = vshrl.u32 %v277, 7
        %v279 = vadd.s32 %v278, 8
        %v280 = vadd.s32 %v278, 16
        %v281 = vadd.s32 %v278, 24
        %vm282 = vcmp.lt.s32.totalorder %v278, 0
        %v283 = vsub.s32 0, %v278
        %v284 = vsel %vm282, %v283, %v278
        %v285 = vshrl.u32 %v284, 4
        %v286 = vand.u32 %v284, 15
        %v287 = vsub.s32 0, %v286
        %v288 = vsel %vm282, %v287, %v286
        %vm289 = vcmp.lt.s32.totalorder %v279, 0
        %v290 = vsub.s32 0, %v279
        %v291 = vsel %vm289, %v290, %v279
        %v292 = vshrl.u32 %v291, 4
        %v293 = vand.u32 %v291, 15
        %v294 = vsub.s32 0, %v293
        %v295 = vsel %vm289, %v294, %v293
        %vm296 = vcmp.lt.s32.totalorder %v280, 0
        %v297 = vsub.s32 0, %v280
        %v298 = vsel %vm296, %v297, %v280
        %v299 = vshrl.u32 %v298, 4
        %v300 = vand.u32 %v298, 15
        %v301 = vsub.s32 0, %v300
        %v302 = vsel %vm296, %v301, %v300
        %vm303 = vcmp.lt.s32.totalorder %v281, 0
        %v304 = vsub.s32 0, %v281
        %v305 = vsel %vm303, %v304, %v281
        %v306 = vshrl.u32 %v305, 4
        %v307 = vand.u32 %v305, 15
        %v308 = vsub.s32 0, %v307
        %v309 = vsel %vm303, %v308, %v307
        %vm310 = vcmp.ne.s32.totalorder %v288, 0
        %vm311 = vcmp.ne.s32.totalorder %v295, 0
        %vm312 = vcmp.ne.s32.totalorder %v302, 0
        %vm313 = vcmp.ne.s32.totalorder %v309, 0
        %vm314 = vcmp.lt.s32.totalorder %v288, 0
        %vm315 = vcmp.lt.s32.totalorder %v295, 0
        %vm316 = vcmp.lt.s32.totalorder %v302, 0
        %vm317 = vcmp.lt.s32.totalorder %v309, 0
        %vm318 = vmand %vm314, %vm310
        %vm319 = vmand %vm315, %vm311
        %vm320 = vmand %vm316, %vm312
        %vm321 = vmand %vm317, %vm313
        %v322 = vadd.s32 %v288, 16
        %v323 = vadd.s32 %v295, 16
        %v324 = vadd.s32 %v302, 16
        %v325 = vadd.s32 %v309, 16
        %v326 = vsel %vm318, %v322, %v288
        %v327 = vsel %vm319, %v323, %v295
        %v328 = vsel %vm320, %v324, %v302
        %v329 = vsel %vm321, %v325, %v309
        %v330 = vld [vmem:[%s237] sm:$0xf]
        %v331 = vld [vmem:[%s237 + $0x4] sm:$0xf]
        %v332 = vld [vmem:[%s237 + $0x8] sm:$0xf]
        %v333 = vld [vmem:[%s237 + $0xc] sm:$0xf]
        %v334 = vunpack.c.l.bf16 %v330
        %v335 = vunpack.c.l.bf16 %v331
        %v336 = vunpack.c.l.bf16 %v332
        %v337 = vunpack.c.l.bf16 %v333
        %v342 = vunpack.c.l.b16 %v330
        %v343 = vunpack.c.l.b16 %v331
        %v344 = vunpack.c.l.b16 %v332
        %v345 = vunpack.c.l.b16 %v333
        %v346 = vpack.c.b16 %v343, %v342
        %v347 = vpack.c.b16 %v345, %v344
        %vm348 = vsmask.f32 256
        %v350 = vshrl.u32 %v346, 16
        %v352 = vrot.slane %v350, 7
        %v353 = vshll.u32 %v346, 16
        %v355 = vor.u32 %v352, %v353
        %v357 = vshrl.u32 %v347, 16
        %v359 = vrot.slane %v357, 7
        %v360 = vshll.u32 %v347, 16
        %v362 = vor.u32 %v359, %v360
        %v363 = vsel %vm348, %v352, %v362
        %vm366 = vcmask 1040384
        %vm367 = vmand %vm366, %vm348
        %v368 = vsel %vm367, 0, %v355
        %vm369 = vcmp.lt.s32.totalorder %v326, 1
        %vm370 = vcmp.lt.s32.totalorder %v327, 1
        %vm371 = vcmp.lt.s32.totalorder %v328, 1
        %vm372 = vcmp.lt.s32.totalorder %v329, 1
        %v373 = vsel %vm369, 1, 0
        %v374 = vsel %vm370, 1, 0
        %v375 = vsel %vm371, 1, 0
        %v376 = vsel %vm372, 1, 0
        %vm377 = vcmp.eq.s32.totalorder %v373, 1
        %vm378 = vcmp.eq.s32.totalorder %v374, 1
        %vm379 = vcmp.eq.s32.totalorder %v375, 1
        %vm380 = vcmp.eq.s32.totalorder %v376, 1
        %vm381 = vmpackc.low %vm377, %vm377
        %vm382 = vmpackc.low %vm378, %vm378
        %vm383 = vmpackc.low %vm379, %vm379
        %vm384 = vmpackc.low %vm380, %vm380
        %v385 = vsel %vm381, 65537, 0
        %v386 = vsel %vm382, 65537, 0
        %v387 = vsel %vm383, 65537, 0
        %v388 = vsel %vm384, 65537, 0
        %v389 = vunpack.c.l.b16 %v385
        %v390 = vunpack.c.l.b16 %v386
        %v391 = vunpack.c.l.b16 %v387
        %v392 = vunpack.c.l.b16 %v388
        %v393 = vpack.c.b16 %v390, %v389
        %v394 = vpack.c.b16 %v392, %v391
        %vm395 = vcmp.ne.s16.totalorder %v393, 0
        %vm396 = vcmp.ne.s16.totalorder %v394, 0
        %v397 = vsel %vm395, 0, %v368
        %v398 = vsel %vm396, 0, %v363
        %vm399 = vsmask.f32 7424
        %v400 = vrot.slane %v353, 1
        %v401 = vor.u32 %v350, %v400
        %v402 = vrot.slane %v360, 1
        %v403 = vsel %vm399, %v401, %v402
        %v404 = vor.u32 %v357, %v402
        %vm407 = vcmask 1047552
        %vm408 = vmand %vm407, %vm399
        %v409 = vsel %vm408, %v404, 0
        %vm410 = vcmp.ge.s32.totalorder %v326, 15
        %vm411 = vcmp.ge.s32.totalorder %v327, 15
        %vm412 = vcmp.ge.s32.totalorder %v328, 15
        %vm413 = vcmp.ge.s32.totalorder %v329, 15
        %v414 = vsel %vm410, 1, 0
        %v415 = vsel %vm411, 1, 0
        %v416 = vsel %vm412, 1, 0
        %v417 = vsel %vm413, 1, 0
        %vm418 = vcmp.eq.s32.totalorder %v414, 1
        %vm419 = vcmp.eq.s32.totalorder %v415, 1
        %vm420 = vcmp.eq.s32.totalorder %v416, 1
        %vm421 = vcmp.eq.s32.totalorder %v417, 1
        %vm422 = vmpackc.low %vm418, %vm418
        %vm423 = vmpackc.low %vm419, %vm419
        %vm424 = vmpackc.low %vm420, %vm420
        %vm425 = vmpackc.low %vm421, %vm421
        %v426 = vsel %vm422, 65537, 0
        %v427 = vsel %vm423, 65537, 0
        %v428 = vsel %vm424, 65537, 0
        %v429 = vsel %vm425, 65537, 0
        %v430 = vunpack.c.l.b16 %v426
        %v431 = vunpack.c.l.b16 %v427
        %v432 = vunpack.c.l.b16 %v428
        %v433 = vunpack.c.l.b16 %v429
        %v434 = vpack.c.b16 %v431, %v430
        %v435 = vpack.c.b16 %v433, %v432
        %vm436 = vcmp.ne.s16.totalorder %v434, 0
        %vm437 = vcmp.ne.s16.totalorder %v435, 0
        %v438 = vsel %vm436, 0, %v403
        %v439 = vsel %vm437, 0, %v409
        %v442 = vld [vmem:[#allocation5] sm:$0xf]
        %v443 = vld [vmem:[#allocation5 + $0x4] sm:$0xf]
        %v444 = vld [vmem:[#allocation5 + $0x8] sm:$0xf]
        %v445 = vld [vmem:[#allocation5 + $0xc] sm:$0xf]
        %v446 = vld [vmem:[#allocation5 + $0x10] sm:$0xf]
        %v447 = vld [vmem:[#allocation5 + $0x14] sm:$0xf]
        %v448 = vld [vmem:[#allocation5 + $0x18] sm:$0xf]
        %v449 = vld [vmem:[#allocation5 + $0x1c] sm:$0xf]
        %v450 = vld [vmem:[#allocation5 + $0x20] sm:$0xf]
        %v451 = vld [vmem:[#allocation5 + $0x24] sm:$0xf]
        %v452 = vld [vmem:[#allocation5 + $0x28] sm:$0xf]
        %v453 = vld [vmem:[#allocation5 + $0x2c] sm:$0xf]
        %v454 = vld [vmem:[#allocation5 + $0x30] sm:$0xf]
        %v455 = vld [vmem:[#allocation5 + $0x34] sm:$0xf]
        %v456 = vld [vmem:[#allocation5 + $0x38] sm:$0xf]
        %v457 = vld [vmem:[#allocation5 + $0x3c] sm:$0xf]
        %v458 = vld [vmem:[#allocation5 + $0x40] sm:$0xf]
        %v459 = vld [vmem:[#allocation5 + $0x44] sm:$0xf]
        %v460 = vld [vmem:[#allocation5 + $0x48] sm:$0xf]
        %v461 = vld [vmem:[#allocation5 + $0x4c] sm:$0xf]
        %v462 = vld [vmem:[#allocation5 + $0x50] sm:$0xf]
        %v463 = vld [vmem:[#allocation5 + $0x54] sm:$0xf]
        %v464 = vld [vmem:[#allocation5 + $0x58] sm:$0xf]
        %v465 = vld [vmem:[#allocation5 + $0x5c] sm:$0xf]
        %v466 = vld [vmem:[#allocation5 + $0x60] sm:$0xf]
        %v467 = vld [vmem:[#allocation5 + $0x64] sm:$0xf]
        %v468 = vld [vmem:[#allocation5 + $0x68] sm:$0xf]
        %v469 = vld [vmem:[#allocation5 + $0x6c] sm:$0xf]
        %v470 = vld [vmem:[#allocation5 + $0x70] sm:$0xf]
        %v471 = vld [vmem:[#allocation5 + $0x74] sm:$0xf]
        %v472 = vld [vmem:[#allocation5 + $0x78] sm:$0xf]
        %v473 = vld [vmem:[#allocation5 + $0x7c] sm:$0xf]
        %v474 = vld [vmem:[#allocation5 + $0x80] sm:$0xf]
        %v475 = vld [vmem:[#allocation5 + $0x84] sm:$0xf]
        %v476 = vld [vmem:[#allocation5 + $0x88] sm:$0xf]
        %v477 = vld [vmem:[#allocation5 + $0x8c] sm:$0xf]
        %v478 = vld [vmem:[#allocation5 + $0x90] sm:$0xf]
        %v479 = vld [vmem:[#allocation5 + $0x94] sm:$0xf]
        %v480 = vld [vmem:[#allocation5 + $0x98] sm:$0xf]
        %v481 = vld [vmem:[#allocation5 + $0x9c] sm:$0xf]
        %v482 = vld [vmem:[#allocation5 + $0xa0] sm:$0xf]
        %v483 = vld [vmem:[#allocation5 + $0xa4] sm:$0xf]
        %v484 = vld [vmem:[#allocation5 + $0xa8] sm:$0xf]
        %v485 = vld [vmem:[#allocation5 + $0xac] sm:$0xf]
        %v486 = vld [vmem:[#allocation5 + $0xb0] sm:$0xf]
        %v487 = vld [vmem:[#allocation5 + $0xb4] sm:$0xf]
        %v488 = vld [vmem:[#allocation5 + $0xb8] sm:$0xf]
        %v489 = vld [vmem:[#allocation5 + $0xbc] sm:$0xf]
        %v490 = vld [vmem:[%s2] sm:$0x1]
        %v492 = vlaneseq
        %v493 = vshrl.u32 %v492, 7
        %v494 = vsub.s32 0, %v493
        %v495 = vrot.slane %v490, %v494
        %v545 = vunpack.c.l.b16 %v442
        %v546 = vunpack.c.l.b16 %v443
        %v547 = vunpack.c.l.b16 %v444
        %v548 = vunpack.c.l.b16 %v445
        %v549 = vunpack.c.l.b16 %v446
        %v550 = vunpack.c.l.b16 %v447
        %v551 = vunpack.c.l.b16 %v448
        %v552 = vunpack.c.l.b16 %v449
        %v553 = vunpack.c.l.b16 %v450
        %v554 = vunpack.c.l.b16 %v451
        %v555 = vunpack.c.l.b16 %v452
        %v556 = vunpack.c.l.b16 %v453
        %v557 = vunpack.c.l.b16 %v454
        %v558 = vunpack.c.l.b16 %v455
        %v559 = vunpack.c.l.b16 %v456
        %v560 = vunpack.c.l.b16 %v457
        %v561 = vunpack.c.l.b16 %v458
        %v562 = vunpack.c.l.b16 %v459
        %v563 = vunpack.c.l.b16 %v460
        %v564 = vunpack.c.l.b16 %v461
        %v565 = vunpack.c.l.b16 %v462
        %v566 = vunpack.c.l.b16 %v463
        %v567 = vunpack.c.l.b16 %v464
        %v568 = vunpack.c.l.b16 %v465
        %v569 = vunpack.c.l.b16 %v466
        %v570 = vunpack.c.l.b16 %v467
        %v571 = vunpack.c.l.b16 %v468
        %v572 = vunpack.c.l.b16 %v469
        %v573 = vunpack.c.l.b16 %v470
        %v574 = vunpack.c.l.b16 %v471
        %v575 = vunpack.c.l.b16 %v472
        %v576 = vunpack.c.l.b16 %v473
        %v577 = vunpack.c.l.b16 %v474
        %v578 = vunpack.c.l.b16 %v475
        %v579 = vunpack.c.l.b16 %v476
        %v580 = vunpack.c.l.b16 %v477
        %v581 = vunpack.c.l.b16 %v478
        %v582 = vunpack.c.l.b16 %v479
        %v583 = vunpack.c.l.b16 %v480
        %v584 = vunpack.c.l.b16 %v481
        %v585 = vunpack.c.l.b16 %v482
        %v586 = vunpack.c.l.b16 %v483
        %v587 = vunpack.c.l.b16 %v484
        %v588 = vunpack.c.l.b16 %v485
        %v589 = vunpack.c.l.b16 %v486
        %v590 = vunpack.c.l.b16 %v487
        %v591 = vunpack.c.l.b16 %v488
        %v592 = vunpack.c.l.b16 %v489
        %v593 = vpack.c.b16 %v546, %v545
        %v594 = vpack.c.b16 %v548, %v547
        %v595 = vpack.c.b16 %v550, %v549
        %v596 = vpack.c.b16 %v552, %v551
        %v597 = vpack.c.b16 %v554, %v553
        %v598 = vpack.c.b16 %v556, %v555
        %v599 = vpack.c.b16 %v558, %v557
        %v600 = vpack.c.b16 %v560, %v559
        %v601 = vpack.c.b16 %v562, %v561
        %v602 = vpack.c.b16 %v564, %v563
        %v603 = vpack.c.b16 %v566, %v565
        %v604 = vpack.c.b16 %v568, %v567
        %v605 = vpack.c.b16 %v570, %v569
        %v606 = vpack.c.b16 %v572, %v571
        %v607 = vpack.c.b16 %v574, %v573
        %v608 = vpack.c.b16 %v576, %v575
        %v609 = vpack.c.b16 %v578, %v577
        %v610 = vpack.c.b16 %v580, %v579
        %v611 = vpack.c.b16 %v582, %v581
        %v612 = vpack.c.b16 %v584, %v583
        %v613 = vpack.c.b16 %v586, %v585
        %v614 = vpack.c.b16 %v588, %v587
        %v615 = vpack.c.b16 %v590, %v589
        %v616 = vpack.c.b16 %v592, %v591
        %641 = vmatprep.subr.bf16.mxu0 0
        %642 = vmatpush1.bf16.msra.mxu0 %v593
        %643 = vmatprep.subr.bf16.mxu0 0
        %644 = vmatpush1.bf16.msra.mxu0 %v594
        %645 = vmatprep.subr.bf16.mxu0 0
        %646 = vmatpush1.bf16.msra.mxu0 %v595
        %647 = vmatprep.subr.bf16.mxu0 0
        %648 = vmatpush1.bf16.msra.mxu0 %v596
        %649 = vmatprep.subr.bf16.mxu0 0
        %650 = vmatpush1.bf16.msra.mxu0 %v597
        %651 = vmatprep.subr.bf16.mxu0 0
        %652 = vmatpush1.bf16.msra.mxu0 %v598
        %653 = vmatprep.subr.bf16.mxu0 0
        %654 = vmatpush1.bf16.msra.mxu0 %v599
        %655 = vmatprep.subr.bf16.mxu0 0
        %656 = vmatpush1.bf16.msra.mxu0 %v600
        %657 = vmatprep.subr.bf16.mxu0 0
        %658 = vmatpush1.bf16.msra.mxu0 %v601
        %659 = vmatprep.subr.bf16.mxu0 0
        %660 = vmatpush1.bf16.msra.mxu0 %v602
        %661 = vmatprep.subr.bf16.mxu0 0
        %662 = vmatpush1.bf16.msra.mxu0 %v603
        %663 = vmatprep.subr.bf16.mxu0 0
        %664 = vmatpush1.bf16.msra.mxu0 %v604
        %665 = vmatprep.subr.bf16.mxu0 0
        %666 = vmatpush1.bf16.msra.mxu0 %v605
        %667 = vmatprep.subr.bf16.mxu0 0
        %668 = vmatpush1.bf16.msra.mxu0 %v606
        %669 = vmatprep.subr.bf16.mxu0 0
        %670 = vmatpush1.bf16.msra.mxu0 %v607
        %671 = vmatprep.subr.bf16.mxu0 0
        %672 = vmatpush1.bf16.msra.mxu0 %v608
        %673 = vmatprep.mubr.bf16.mxu0 %v346
        %674 = vmatmul.mubr.bf16.gmra.mrb[0].mxu0 %v397
        %v675 = vpop.f32.mrb[0].mxu0
        %v676 = vadd.f32 %v495, %v675
        %v677 = vpop.f32.mrb[0].mxu0
        %v678 = vpop.f32.mrb[0].mxu0
        %v679 = vadd.f32 %v495, %v678
        %v680 = vpop.f32.mrb[0].mxu0
        %681 = vmatprep.mubr.bf16.mxu0 %v347
        %682 = vmatmul.mubr.bf16.gmra.mrb[0].mxu0 %v398
        %v683 = vpop.f32.mrb[0].mxu0
        %v684 = vadd.f32 %v495, %v683
        %v685 = vpop.f32.mrb[0].mxu0
        %v686 = vpop.f32.mrb[0].mxu0
        %v687 = vadd.f32 %v495, %v686
        %v688 = vpop.f32.mrb[0].mxu0
        %689 = vdwg.mxu0
        %690 = vmatprep.subr.bf16.mxu0 0
        %691 = vmatpush1.bf16.msra.mxu0 %v609
        %692 = vmatprep.subr.bf16.mxu0 0
        %693 = vmatpush1.bf16.msra.mxu0 %v610
        %694 = vmatprep.subr.bf16.mxu0 0
        %695 = vmatpush1.bf16.msra.mxu0 %v611
        %696 = vmatprep.subr.bf16.mxu0 0
        %697 = vmatpush1.bf16.msra.mxu0 %v612
        %698 = vmatprep.subr.bf16.mxu0 0
        %699 = vmatpush1.bf16.msra.mxu0 %v613
        %700 = vmatprep.subr.bf16.mxu0 0
        %701 = vmatpush1.bf16.msra.mxu0 %v614
        %702 = vmatprep.subr.bf16.mxu0 0
        %703 = vmatpush1.bf16.msra.mxu0 %v615
        %704 = vmatprep.subr.bf16.mxu0 0
        %705 = vmatpush1.bf16.msra.mxu0 %v616
        %706 = vmatprep.subr.bf16.mxu0 0
        %707 = vmatpush1.bf16.msra.mxu0 0
        %708 = vmatprep.subr.bf16.mxu0 0
        %709 = vmatpush1.bf16.msra.mxu0 0
        %710 = vmatprep.subr.bf16.mxu0 0
        %711 = vmatpush1.bf16.msra.mxu0 0
        %712 = vmatprep.subr.bf16.mxu0 0
        %713 = vmatpush1.bf16.msra.mxu0 0
        %714 = vmatprep.subr.bf16.mxu0 0
        %715 = vmatpush1.bf16.msra.mxu0 0
        %716 = vmatprep.subr.bf16.mxu0 0
        %717 = vmatpush1.bf16.msra.mxu0 0
        %718 = vmatprep.subr.bf16.mxu0 0
        %719 = vmatpush1.bf16.msra.mxu0 0
        %720 = vmatprep.subr.bf16.mxu0 0
        %721 = vmatpush1.bf16.msra.mxu0 0
        %722 = vmatprep.mubr.bf16.mxu0 0
        %723 = vmatmul.mubr.bf16.gmra.mrb[0].mxu0 %v438
        %v724 = vpop.f32.mrb[0].mxu0
        %v725 = vadd.f32 %v676, %v724
        %v726 = vpop.f32.mrb[0].mxu0
        %v727 = vpop.f32.mrb[0].mxu0
        %v728 = vadd.f32 %v679, %v727
        %v729 = vpop.f32.mrb[0].mxu0
        %730 = vmatprep.mubr.bf16.mxu0 0
        %731 = vmatmul.mubr.bf16.gmra.mrb[0].mxu0 %v439
        %v732 = vpop.f32.mrb[0].mxu0
        %v733 = vadd.f32 %v684, %v732
        %v734 = vpop.f32.mrb[0].mxu0
        %v735 = vpop.f32.mrb[0].mxu0
        %v736 = vadd.f32 %v687, %v735
        %v737 = vpop.f32.mrb[0].mxu0
        %738 = vdwg.mxu0
        %v739 = vmax.f32 %v725, 0.0
        %v740 = vmax.f32 %v728, 0.0
        %v741 = vmax.f32 %v733, 0.0
        %v742 = vmax.f32 %v736, 0.0
        %v743 = vpack.c.bf16 %v740, %v739
        %v744 = vpack.c.bf16 %v742, %v741
        %v746 = vshrl.u32 %v743, 16
        %v748 = vrot.slane %v746, 7
        %v749 = vshll.u32 %v743, 16
        %v751 = vor.u32 %v748, %v749
        %v753 = vshrl.u32 %v744, 16
        %v755 = vrot.slane %v753, 7
        %v756 = vshll.u32 %v744, 16
        %v758 = vor.u32 %v755, %v756
        %v759 = vsel %vm348, %v748, %v758
        %v762 = vsel %vm367, 0, %v751
        %v763 = vsel %vm395, 0, %v762
        %v764 = vsel %vm396, 0, %v759
        %v765 = vrot.slane %v749, 1
        %v766 = vor.u32 %v746, %v765
        %v767 = vrot.slane %v756, 1
        %v768 = vsel %vm399, %v766, %v767
        %v769 = vor.u32 %v753, %v767
        %v772 = vsel %vm408, %v769, 0
        %v773 = vsel %vm436, 0, %v768
        %v774 = vsel %vm437, 0, %v772
        %v775 = vld [vmem:[#allocation7] sm:$0xf]
        %v776 = vld [vmem:[#allocation7 + $0x4] sm:$0xf]
        %v777 = vld [vmem:[#allocation7 + $0x8] sm:$0xf]
        %v778 = vld [vmem:[#allocation7 + $0xc] sm:$0xf]
        %v779 = vld [vmem:[#allocation7 + $0x10] sm:$0xf]
        %v780 = vld [vmem:[#allocation7 + $0x14] sm:$0xf]
        %v781 = vld [vmem:[#allocation7 + $0x18] sm:$0xf]
        %v782 = vld [vmem:[#allocation7 + $0x1c] sm:$0xf]
        %v783 = vld [vmem:[#allocation7 + $0x20] sm:$0xf]
        %v784 = vld [vmem:[#allocation7 + $0x24] sm:$0xf]
        %v785 = vld [vmem:[#allocation7 + $0x28] sm:$0xf]
        %v786 = vld [vmem:[#allocation7 + $0x2c] sm:$0xf]
        %v787 = vld [vmem:[#allocation7 + $0x30] sm:$0xf]
        %v788 = vld [vmem:[#allocation7 + $0x34] sm:$0xf]
        %v789 = vld [vmem:[#allocation7 + $0x38] sm:$0xf]
        %v790 = vld [vmem:[#allocation7 + $0x3c] sm:$0xf]
        %v791 = vld [vmem:[#allocation7 + $0x40] sm:$0xf]
        %v792 = vld [vmem:[#allocation7 + $0x44] sm:$0xf]
        %v793 = vld [vmem:[#allocation7 + $0x48] sm:$0xf]
        %v794 = vld [vmem:[#allocation7 + $0x4c] sm:$0xf]
        %v795 = vld [vmem:[#allocation7 + $0x50] sm:$0xf]
        %v796 = vld [vmem:[#allocation7 + $0x54] sm:$0xf]
        %v797 = vld [vmem:[#allocation7 + $0x58] sm:$0xf]
        %v798 = vld [vmem:[#allocation7 + $0x5c] sm:$0xf]
        %v799 = vld [vmem:[#allocation7 + $0x60] sm:$0xf]
        %v800 = vld [vmem:[#allocation7 + $0x64] sm:$0xf]
        %v801 = vld [vmem:[#allocation7 + $0x68] sm:$0xf]
        %v802 = vld [vmem:[#allocation7 + $0x6c] sm:$0xf]
        %v803 = vld [vmem:[#allocation7 + $0x70] sm:$0xf]
        %v804 = vld [vmem:[#allocation7 + $0x74] sm:$0xf]
        %v805 = vld [vmem:[#allocation7 + $0x78] sm:$0xf]
        %v806 = vld [vmem:[#allocation7 + $0x7c] sm:$0xf]
        %v807 = vld [vmem:[#allocation7 + $0x80] sm:$0xf]
        %v808 = vld [vmem:[#allocation7 + $0x84] sm:$0xf]
        %v809 = vld [vmem:[#allocation7 + $0x88] sm:$0xf]
        %v810 = vld [vmem:[#allocation7 + $0x8c] sm:$0xf]
        %v811 = vld [vmem:[#allocation7 + $0x90] sm:$0xf]
        %v812 = vld [vmem:[#allocation7 + $0x94] sm:$0xf]
        %v813 = vld [vmem:[#allocation7 + $0x98] sm:$0xf]
        %v814 = vld [vmem:[#allocation7 + $0x9c] sm:$0xf]
        %v815 = vld [vmem:[#allocation7 + $0xa0] sm:$0xf]
        %v816 = vld [vmem:[#allocation7 + $0xa4] sm:$0xf]
        %v817 = vld [vmem:[#allocation7 + $0xa8] sm:$0xf]
        %v818 = vld [vmem:[#allocation7 + $0xac] sm:$0xf]
        %v819 = vld [vmem:[#allocation7 + $0xb0] sm:$0xf]
        %v820 = vld [vmem:[#allocation7 + $0xb4] sm:$0xf]
        %v821 = vld [vmem:[#allocation7 + $0xb8] sm:$0xf]
        %v822 = vld [vmem:[#allocation7 + $0xbc] sm:$0xf]
        %v823 = vld [vmem:[%s4] sm:$0x1]
        %v825 = vlaneseq
        %v826 = vshrl.u32 %v825, 7
        %v827 = vsub.s32 0, %v826
        %v828 = vrot.slane %v823, %v827
        %v878 = vunpack.c.l.b16 %v775
        %v879 = vunpack.c.l.b16 %v776
        %v880 = vunpack.c.l.b16 %v777
        %v881 = vunpack.c.l.b16 %v778
        %v882 = vunpack.c.l.b16 %v779
        %v883 = vunpack.c.l.b16 %v780
        %v884 = vunpack.c.l.b16 %v781
        %v885 = vunpack.c.l.b16 %v782
        %v886 = vunpack.c.l.b16 %v783
        %v887 = vunpack.c.l.b16 %v784
        %v888 = vunpack.c.l.b16 %v785
        %v889 = vunpack.c.l.b16 %v786
        %v890 = vunpack.c.l.b16 %v787
        %v891 = vunpack.c.l.b16 %v788
        %v892 = vunpack.c.l.b16 %v789
        %v893 = vunpack.c.l.b16 %v790
        %v894 = vunpack.c.l.b16 %v791
        %v895 = vunpack.c.l.b16 %v792
        %v896 = vunpack.c.l.b16 %v793
        %v897 = vunpack.c.l.b16 %v794
        %v898 = vunpack.c.l.b16 %v795
        %v899 = vunpack.c.l.b16 %v796
        %v900 = vunpack.c.l.b16 %v797
        %v901 = vunpack.c.l.b16 %v798
        %v902 = vunpack.c.l.b16 %v799
        %v903 = vunpack.c.l.b16 %v800
        %v904 = vunpack.c.l.b16 %v801
        %v905 = vunpack.c.l.b16 %v802
        %v906 = vunpack.c.l.b16 %v803
        %v907 = vunpack.c.l.b16 %v804
        %v908 = vunpack.c.l.b16 %v805
        %v909 = vunpack.c.l.b16 %v806
        %v910 = vunpack.c.l.b16 %v807
        %v911 = vunpack.c.l.b16 %v808
        %v912 = vunpack.c.l.b16 %v809
        %v913 = vunpack.c.l.b16 %v810
        %v914 = vunpack.c.l.b16 %v811
        %v915 = vunpack.c.l.b16 %v812
        %v916 = vunpack.c.l.b16 %v813
        %v917 = vunpack.c.l.b16 %v814
        %v918 = vunpack.c.l.b16 %v815
        %v919 = vunpack.c.l.b16 %v816
        %v920 = vunpack.c.l.b16 %v817
        %v921 = vunpack.c.l.b16 %v818
        %v922 = vunpack.c.l.b16 %v819
        %v923 = vunpack.c.l.b16 %v820
        %v924 = vunpack.c.l.b16 %v821
        %v925 = vunpack.c.l.b16 %v822
        %v926 = vpack.c.b16 %v879, %v878
        %v927 = vpack.c.b16 %v881, %v880
        %v928 = vpack.c.b16 %v883, %v882
        %v929 = vpack.c.b16 %v885, %v884
        %v930 = vpack.c.b16 %v887, %v886
        %v931 = vpack.c.b16 %v889, %v888
        %v932 = vpack.c.b16 %v891, %v890
        %v933 = vpack.c.b16 %v893, %v892
        %v934 = vpack.c.b16 %v895, %v894
        %v935 = vpack.c.b16 %v897, %v896
        %v936 = vpack.c.b16 %v899, %v898
        %v937 = vpack.c.b16 %v901, %v900
        %v938 = vpack.c.b16 %v903, %v902
        %v939 = vpack.c.b16 %v905, %v904
        %v940 = vpack.c.b16 %v907, %v906
        %v941 = vpack.c.b16 %v909, %v908
        %v942 = vpack.c.b16 %v911, %v910
        %v943 = vpack.c.b16 %v913, %v912
        %v944 = vpack.c.b16 %v915, %v914
        %v945 = vpack.c.b16 %v917, %v916
        %v946 = vpack.c.b16 %v919, %v918
        %v947 = vpack.c.b16 %v921, %v920
        %v948 = vpack.c.b16 %v923, %v922
        %v949 = vpack.c.b16 %v925, %v924
        %974 = vmatprep.subr.bf16.mxu0 0
        %975 = vmatpush1.bf16.msra.mxu0 %v926
        %976 = vmatprep.subr.bf16.mxu0 0
        %977 = vmatpush1.bf16.msra.mxu0 %v927
        %978 = vmatprep.subr.bf16.mxu0 0
        %979 = vmatpush1.bf16.msra.mxu0 %v928
        %980 = vmatprep.subr.bf16.mxu0 0
        %981 = vmatpush1.bf16.msra.mxu0 %v929
        %982 = vmatprep.subr.bf16.mxu0 0
        %983 = vmatpush1.bf16.msra.mxu0 %v930
        %984 = vmatprep.subr.bf16.mxu0 0
        %985 = vmatpush1.bf16.msra.mxu0 %v931
        %986 = vmatprep.subr.bf16.mxu0 0
        %987 = vmatpush1.bf16.msra.mxu0 %v932
        %988 = vmatprep.subr.bf16.mxu0 0
        %989 = vmatpush1.bf16.msra.mxu0 %v933
        %990 = vmatprep.subr.bf16.mxu0 0
        %991 = vmatpush1.bf16.msra.mxu0 %v934
        %992 = vmatprep.subr.bf16.mxu0 0
        %993 = vmatpush1.bf16.msra.mxu0 %v935
        %994 = vmatprep.subr.bf16.mxu0 0
        %995 = vmatpush1.bf16.msra.mxu0 %v936
        %996 = vmatprep.subr.bf16.mxu0 0
        %997 = vmatpush1.bf16.msra.mxu0 %v937
        %998 = vmatprep.subr.bf16.mxu0 0
        %999 = vmatpush1.bf16.msra.mxu0 %v938
        %1000 = vmatprep.subr.bf16.mxu0 0
        %1001 = vmatpush1.bf16.msra.mxu0 %v939
        %1002 = vmatprep.subr.bf16.mxu0 0
        %1003 = vmatpush1.bf16.msra.mxu0 %v940
        %1004 = vmatprep.subr.bf16.mxu0 0
        %1005 = vmatpush1.bf16.msra.mxu0 %v941
        %1006 = vmatprep.mubr.bf16.mxu0 %v743
        %1007 = vmatmul.mubr.bf16.gmra.mrb[0].mxu0 %v763
        %v1008 = vpop.f32.mrb[0].mxu0
        %v1009 = vadd.f32 %v828, %v1008
        %v1010 = vpop.f32.mrb[0].mxu0
        %v1011 = vpop.f32.mrb[0].mxu0
        %v1012 = vadd.f32 %v828, %v1011
        %v1013 = vpop.f32.mrb[0].mxu0
        %1014 = vmatprep.mubr.bf16.mxu0 %v744
        %1015 = vmatmul.mubr.bf16.gmra.mrb[0].mxu0 %v764
        %v1016 = vpop.f32.mrb[0].mxu0
        %v1017 = vadd.f32 %v828, %v1016
        %v1018 = vpop.f32.mrb[0].mxu0
        %v1019 = vpop.f32.mrb[0].mxu0
        %v1020 = vadd.f32 %v828, %v1019
        %v1021 = vpop.f32.mrb[0].mxu0
        %1022 = vdwg.mxu0
        %1023 = vmatprep.subr.bf16.mxu0 0
        %1024 = vmatpush1.bf16.msra.mxu0 %v942
        %1025 = vmatprep.subr.bf16.mxu0 0
        %1026 = vmatpush1.bf16.msra.mxu0 %v943
        %1027 = vmatprep.subr.bf16.mxu0 0
        %1028 = vmatpush1.bf16.msra.mxu0 %v944
        %1029 = vmatprep.subr.bf16.mxu0 0
        %1030 = vmatpush1.bf16.msra.mxu0 %v945
        %1031 = vmatprep.subr.bf16.mxu0 0
        %1032 = vmatpush1.bf16.msra.mxu0 %v946
        %1033 = vmatprep.subr.bf16.mxu0 0
        %1034 = vmatpush1.bf16.msra.mxu0 %v947
        %1035 = vmatprep.subr.bf16.mxu0 0
        %1036 = vmatpush1.bf16.msra.mxu0 %v948
        %1037 = vmatprep.subr.bf16.mxu0 0
        %1038 = vmatpush1.bf16.msra.mxu0 %v949
        %1039 = vmatprep.subr.bf16.mxu0 0
        %1040 = vmatpush1.bf16.msra.mxu0 0
        %1041 = vmatprep.subr.bf16.mxu0 0
        %1042 = vmatpush1.bf16.msra.mxu0 0
        %1043 = vmatprep.subr.bf16.mxu0 0
        %1044 = vmatpush1.bf16.msra.mxu0 0
        %1045 = vmatprep.subr.bf16.mxu0 0
        %1046 = vmatpush1.bf16.msra.mxu0 0
        %1047 = vmatprep.subr.bf16.mxu0 0
        %1048 = vmatpush1.bf16.msra.mxu0 0
        %1049 = vmatprep.subr.bf16.mxu0 0
        %1050 = vmatpush1.bf16.msra.mxu0 0
        %1051 = vmatprep.subr.bf16.mxu0 0
        %1052 = vmatpush1.bf16.msra.mxu0 0
        %1053 = vmatprep.subr.bf16.mxu0 0
        %1054 = vmatpush1.bf16.msra.mxu0 0
        %1055 = vmatprep.mubr.bf16.mxu0 0
        %1056 = vmatmul.mubr.bf16.gmra.mrb[0].mxu0 %v773
        %v1057 = vpop.f32.mrb[0].mxu0
        %v1058 = vadd.f32 %v1009, %v1057
        %v1059 = vpop.f32.mrb[0].mxu0
        %v1060 = vpop.f32.mrb[0].mxu0
        %v1061 = vadd.f32 %v1012, %v1060
        %v1062 = vpop.f32.mrb[0].mxu0
        %1063 = vmatprep.mubr.bf16.mxu0 0
        %1064 = vmatmul.mubr.bf16.gmra.mrb[0].mxu0 %v774
        %v1065 = vpop.f32.mrb[0].mxu0
        %v1066 = vadd.f32 %v1017, %v1065
        %v1067 = vpop.f32.mrb[0].mxu0
        %v1068 = vpop.f32.mrb[0].mxu0
        %v1069 = vadd.f32 %v1020, %v1068
        %v1070 = vpop.f32.mrb[0].mxu0
        %1071 = vdwg.mxu0
        %v1072 = vadd.f32 %v1058, %v334
        %v1073 = vadd.f32 %v1061, %v335
        %v1074 = vadd.f32 %v1066, %v336
        %v1075 = vadd.f32 %v1069, %v337
        %1076 = vst [vmem:[%s271] sm:$0xff] %v1072
        %1077 = vst [vmem:[%s271 + $0x8] sm:$0xff] %v1073
        %1078 = vst [vmem:[%s271 + $0x10] sm:$0xff] %v1074
        %1079 = vst [vmem:[%s271 + $0x18] sm:$0xff] %v1075
        %s1080 = sand.u32 %s141, 1
        %s1081 = scalar_lea.sflag [#allocation4], %s1080
        %s1082 = sand.u32 %s141, 1
        %s1083 = smul.addr %s1082, 32
        %s1084 = scalar_lea.vmem [#allocation8], %s1083
        // Predicated region
        $region53: #{tpu_custom_call.1} parent=39 // pred_check
          %p1085 = pneg %p151
        $region54: #{tpu_custom_call.1} parent=39 // pred_check_branch
          %1087 = sbr.rel (%p1085) target = $region56
        $region55: #{tpu_custom_call.1} parent=39 // pred_region
          %s1088 = smul.u32 4, %s23
          %s1090 = ssub.s32 512, 512
          %1091 = vsyncadd %s1081, %s1090
          %s1092 = smul.addr %s1088, 128
          %s1093 = scalar_lea.hbm %s5, %s1092
          %s1094 = sshll.u32 %s1084, 4
          %s1095 = int_to_ptr.vmem [resolvable:$true] %s1094
          %1100 = dma.vmem_to_hbm [thread:$0]  %s1095, 512, %s1093, %s1081, 128, 128, 8
        $region56: #{tpu_custom_call.1} parent=39 // pred_fallthru
          _
      $region40: #{tpu_custom_call.1} parent=5 // pred_fallthru
        _
      %p1101 = scmp.le.s32.totalorder 2, %s18
      // Predicated region
      $region57: #{tpu_custom_call.1} parent=5 // pred_check
        %p1102 = pneg %p1101
      $region58: #{tpu_custom_call.1} parent=5 // pred_check_branch
        %1104 = sbr.rel (%p1102) target = $region60
      $region59: #{tpu_custom_call.1} parent=5 // pred_region
        %s1105 = ssub.s32 %s18, 2
        // Predicated region
        $region61: #{tpu_custom_call.1} parent=59 // pred_check
          %p1106 = pneg %p157
        $region62: #{tpu_custom_call.1} parent=59 // pred_check_branch
          %1108 = sbr.rel (%p1106) target = $region64
        $region63: #{tpu_custom_call.1} parent=59 // pred_region
          %s1109 = sand.u32 %s142, 1
          %s1110 = scalar_lea.sflag [#allocation4], %s1109
          %s1111 = sand.u32 %s142, 1
          %s1112 = smul.addr %s1111, 32
          %s1113 = scalar_lea.vmem [#allocation8], %s1112
          %1114 = dma.done %s1110, 512
        $region64: #{tpu_custom_call.1} parent=59 // pred_fallthru
          _
      $region60: #{tpu_custom_call.1} parent=5 // pred_fallthru
        _
    $region6: #{tpu_custom_call.1} parent=1 // loop_footer
      %s22 = sadd.s32 1, %s18
    $region7: #{tpu_custom_call.1} parent=1 // loop_footer_branch
      %17 = sbr.rel target = $region3
    $region8: #{tpu_custom_call.1} parent=1 // loop_exit
      _
    %1115 = vsyncpa [#allocation3], 1
    %s1116 = scalar_lea.sflag [#allocation3], 1
    %1117 = vsyncpa %s1116, 1
    %1118 = vsyncpa [#allocation6], 1
    %1119 = vsyncpa [#allocation4], 1
    %s1120 = scalar_lea.sflag [#allocation4], 1
    %1121 = vsyncpa %s1120, 1

</llo_original>
